<compile_context>
chip_gen: v6e
topology: v6e:2x2x1
jax: 0.10.0
libtpu: 0.0.40
codegen_flags: <defaults>
</compile_context>

<pallas_src>
import functools
import math

import jax
import jax.numpy as jnp
from jax import lax
from jax.experimental import pallas as pl
from jax.experimental.pallas import tpu as pltpu

_LANE = 128
_SUB = 8                        # rows per inner streaming step (one f32 vreg)
_DEFAULT_BLOCK_BYTES = 4 << 20  # ~4 MiB per input tile (f32: 8192 x 128)


def _logit(threshold):
    # sigmoid(x) > t  <=>  x > logit(t) for t in (0, 1); clamp at the ends
    # (sigmoid(x) is always in (0, 1)).
    if threshold <= 0.0:
        return float("-inf")
    if threshold >= 1.0:
        return float("inf")
    return math.log(threshold / (1.0 - threshold))


def _pad_value(dtype):
    # A value guaranteed not to exceed the threshold, so padded elements never
    # count as hits (removes any need for an in-kernel mask).
    dtype = jnp.dtype(dtype)
    if jnp.issubdtype(dtype, jnp.floating):
        return float("-inf")
    if jnp.issubdtype(dtype, jnp.integer):
        return int(jnp.iinfo(dtype).min)
    # bool: False.  TODO(synk): only wrong for (nonsensical) negative thresholds.
    return False


def _grid_semantics():
    # v7x has two TensorCores per chip; CORE_PARALLEL shards the independent
    # grid axis across them.  v5e/v6e have a single TC -> plain "parallel".
    try:
        kind = jax.devices()[0].device_kind.lower()
    except Exception:  # pragma: no cover - defensive
        kind = ""
    if "7" in kind:
        return (getattr(pltpu, "CORE_PARALLEL", "parallel"),)
    return ("parallel",)


def _make_count_kernel(br, thr_sr, thr_gt, sr_cast, gt_cast):
    nsub = br // _SUB

    def kernel(sr_ref, gt_ref, out_ref):
        def body(i, carry):
            acc_i, acc_u = carry
            r = pl.multiple_of(i * _SUB, _SUB)
            sr = sr_ref[pl.ds(r, _SUB), :]
            gt = gt_ref[pl.ds(r, _SUB), :]
            if sr_cast:                       # only for non-floating inputs
                sr = sr.astype(jnp.float32)
            if gt_cast:
                gt = gt.astype(jnp.float32)
            sr_hit = sr > jnp.asarray(thr_sr, sr.dtype)   # logit-space compare
            gt_hit = gt > jnp.asarray(thr_gt, gt.dtype)
            sr_f = sr_hit.astype(jnp.float32)
            gt_f = gt_hit.astype(jnp.float32)
            both_f = jnp.logical_and(sr_hit, gt_hit).astype(jnp.float32)
            return acc_i + both_f, acc_u + (sr_f + gt_f)

        zeros = jnp.zeros((_SUB, _LANE), jnp.float32)
        acc_i, acc_u = lax.fori_loop(0, nsub, body, (zeros, zeros),
                                     unroll=min(8, nsub))
        # One lane-dense (1, 16, 128) partial-count tile per grid step:
        # intersection counts in sublanes 0-7, union counts in sublanes 8-15.
        out_ref[...] = jnp.concatenate([acc_i, acc_u], axis=0)[None]

    return kernel


@functools.partial(jax.jit,
                   static_argnames=("threshold", "smooth", "max_block_bytes"))
def dice_loss(SR, GT, threshold, smooth=1e-12,
              max_block_bytes=_DEFAULT_BLOCK_BYTES):
    """Pallas implementation of DiceLoss(threshold).forward(SR, GT)."""
    sr_flat = SR.reshape(-1)          # native dtype, no extra HBM pass
    gt_flat = GT.reshape(-1)
    n = sr_flat.shape[0]

    thr_sr = _logit(float(threshold))  # compare raw logits (no sigmoid / EUP)
    thr_gt = float(threshold)

    # Pad only to a lane multiple (<=127 elements) when needed; pad values are
    # below both thresholds so they never count, whether they land inside the
    # kernel region or in the JAX tail.
    rem = n % _LANE
    if rem:
        pad = _LANE - rem
        sr_flat = jnp.pad(sr_flat, (0, pad),
                          constant_values=_pad_value(sr_flat.dtype))
        gt_flat = jnp.pad(gt_flat, (0, pad),
                          constant_values=_pad_value(gt_flat.dtype))
    rows = sr_flat.shape[0] // _LANE
    sr2 = sr_flat.reshape(rows, _LANE)   # row-major view: no copy
    gt2 = gt_flat.reshape(rows, _LANE)

    # Compare floating inputs in their native dtype (bf16 stays bf16); only
    # bool/int inputs are cast to f32 inside the kernel.
    sr_cast = not jnp.issubdtype(sr2.dtype, jnp.floating)
    gt_cast = not jnp.issubdtype(gt2.dtype, jnp.floating)

    inter = jnp.float32(0.0)
    union = jnp.float32(0.0)

    # Block rows: as large as max_block_bytes allows (multiple of _SUB).
    itemsize = max(sr2.dtype.itemsize, gt2.dtype.itemsize)
    cap_rows = max(_SUB, (max_block_bytes // (_LANE * itemsize)) // _SUB * _SUB)
    br = min(cap_rows, (rows // _SUB) * _SUB)
    num_blocks = rows // br if br > 0 else 0
    rows_main = num_blocks * br

    if num_blocks > 0:
        kernel = _make_count_kernel(br, thr_sr, thr_gt, sr_cast, gt_cast)
        # Double-buffered inputs must fit scoped VMEM (v5e default is 16 MiB).
        inflight = 2 * br * _LANE * (sr2.dtype.itemsize + gt2.dtype.itemsize)
        vmem_limit = int(min(100 << 20, max(32 << 20, inflight + (4 << 20))))
        partials = pl.pallas_call(
            kernel,
            out_shape=jax.ShapeDtypeStruct((num_blocks, 16, _LANE), jnp.float32),
            grid=(num_blocks,),
            in_specs=[
                pl.BlockSpec((br, _LANE), lambda i: (i, 0)),   # SR tile
                pl.BlockSpec((br, _LANE), lambda i: (i, 0)),   # GT tile
            ],
            out_specs=pl.BlockSpec((1, 16, _LANE), lambda i: (i, 0, 0)),
            compiler_params=pltpu.CompilerParams(
                dimension_semantics=_grid_semantics(),
                vmem_limit_bytes=vmem_limit,
            ),
        )(sr2, gt2)
        # Per-block partial counts are exact small integers in f32; the final
        # f32 sum has relative error <~1e-7 even for billion-element inputs.
        inter = inter + jnp.sum(partials[:, :8, :])
        union = union + jnp.sum(partials[:, 8:, :])

    if rows_main < rows:
        # Leftover (< one block of) rows, including any lane padding: a tiny
        # fused XLA compare+reduce — no extra HBM pass worth mentioning.
        sr_t = sr2[rows_main:]
        gt_t = gt2[rows_main:]
        if sr_cast:
            sr_t = sr_t.astype(jnp.float32)
        if gt_cast:
            gt_t = gt_t.astype(jnp.float32)
        sr_hit = sr_t > jnp.asarray(thr_sr, sr_t.dtype)
        gt_hit = gt_t > jnp.asarray(thr_gt, gt_t.dtype)
        inter = inter + jnp.sum(sr_hit & gt_hit, dtype=jnp.float32)
        union = union + (jnp.sum(sr_hit, dtype=jnp.float32)
                         + jnp.sum(gt_hit, dtype=jnp.float32))

    dice = (2.0 * inter) / (union + jnp.float32(smooth))
    return jnp.float32(1.0) - dice


if __name__ == "__main__":
    key = jax.random.PRNGKey(0)
    k1, k2, k3, k4, k5, k6 = jax.random.split(key, 6)

    def reference(SR, GT, threshold, smooth=1e-12):
        sr = jax.nn.sigmoid(SR.astype(jnp.float32)).reshape(-1)
        gt = GT.astype(jnp.float32).reshape(-1)
        inter = jnp.sum((sr > threshold) & (gt > threshold)).astype(jnp.float32)
        union = (jnp.sum(sr > threshold) + jnp.sum(gt > threshold)).astype(jnp.float32)
        return 1.0 - (2.0 * inter) / (union + smooth)

    # Case 1: NCHW = (2, 4, 16, 16) -> 2048 elements, lane-aligned, one block.
    SR1 = jax.random.normal(k1, (2, 4, 16, 16), dtype=jnp.float32)   # logits
    GT1 = (jax.random.uniform(k2, (2, 4, 16, 16)) > 0.5).astype(jnp.float32)
    loss1 = jax.block_until_ready(dice_loss(SR1, GT1, 0.5))
    ref1 = reference(SR1, GT1, 0.5)
    assert jnp.allclose(loss1, ref1, rtol=1e-6, atol=1e-6), (loss1, ref1)

    # Case 2: ragged element count -> exercises the <=127-element pad and the
    # pure-JAX tail rows outside the kernel grid.
    SR2 = jax.random.normal(k3, (2, 3, 17, 13), dtype=jnp.float32)
    GT2 = (jax.random.uniform(k4, (2, 3, 17, 13)) > 0.5).astype(jnp.float32)
    loss2 = jax.block_until_ready(dice_loss(SR2, GT2, 0.3))
    ref2 = reference(SR2, GT2, 0.3)
    assert jnp.allclose(loss2, ref2, rtol=1e-6, atol=1e-6), (loss2, ref2)

    # Case 3: small block-byte cap -> multi-step grid plus leftover tail rows.
    SR3 = jax.random.normal(k5, (2, 4, 16, 18), dtype=jnp.float32)
    GT3 = (jax.random.uniform(k6, (2, 4, 16, 18)) > 0.5).astype(jnp.float32)
    loss3 = jax.block_until_ready(
        dice_loss(SR3, GT3, 0.5, max_block_bytes=8 * 128 * 4))
    ref3 = reference(SR3, GT3, 0.5)
    assert jnp.allclose(loss3, ref3, rtol=1e-6, atol=1e-6), (loss3, ref3)

    print("KERNEL_OK")
</pallas_src>

<mosaic_0001>
module attributes {stable_mosaic.version = 11 : i64} {
  func.func @kernel(%arg0: i32, %arg1: memref<16x128xf32, #tpu.memory_space<vmem>>, %arg2: memref<16x128xf32, #tpu.memory_space<vmem>>, %arg3: memref<1x16x128xf32, #tpu.memory_space<vmem>>) attributes {dimension_semantics = [#tpu.dimension_semantics<parallel>], iteration_bounds = array<i64: 1>, scalar_prefetch = 0 : i64, scratch_operands = 0 : i64, tpu.core_type = #tpu.core_type<tc>, window_params = [{transform_indices = @transform_0, window_bounds = array<i64: 16, 128>}, {transform_indices = @transform_1, window_bounds = array<i64: 16, 128>}, {transform_indices = @transform_2, window_bounds = array<i64: 1, 16, 128>}]} {
    %cst = arith.constant 0.000000e+00 : f32
    %0 = vector.broadcast %cst : f32 to vector<8x128xf32>
    %c0_i32 = arith.constant 0 : i32
    %c8_i32 = arith.constant 8 : i32
    %1 = arith.muli %c0_i32, %c8_i32 : i32
    %2 = tpu.assume_multiple %1, 8 : i32
    %3 = arith.index_cast %2 : i32 to index
    %c0 = arith.constant 0 : index
    %4 = vector.load %arg1[%3, %c0] : memref<16x128xf32, #tpu.memory_space<vmem>>, vector<8x128xf32>
    %5 = arith.index_cast %2 : i32 to index
    %c0_0 = arith.constant 0 : index
    %6 = vector.load %arg2[%5, %c0_0] : memref<16x128xf32, #tpu.memory_space<vmem>>, vector<8x128xf32>
    %cst_1 = arith.constant 0.000000e+00 : f32
    %7 = vector.broadcast %cst_1 : f32 to vector<8x128xf32>
    %8 = arith.cmpf ogt, %4, %7 : vector<8x128xf32>
    %cst_2 = arith.constant 5.000000e-01 : f32
    %9 = vector.broadcast %cst_2 : f32 to vector<8x128xf32>
    %10 = arith.cmpf ogt, %6, %9 : vector<8x128xf32>
    %11 = arith.extui %8 : vector<8x128xi1> to vector<8x128xi32>
    %12 = arith.sitofp %11 : vector<8x128xi32> to vector<8x128xf32>
    %13 = arith.extui %10 : vector<8x128xi1> to vector<8x128xi32>
    %14 = arith.sitofp %13 : vector<8x128xi32> to vector<8x128xf32>
    %15 = arith.andi %8, %10 : vector<8x128xi1>
    %16 = arith.extui %15 : vector<8x128xi1> to vector<8x128xi32>
    %17 = arith.sitofp %16 : vector<8x128xi32> to vector<8x128xf32>
    %18 = arith.addf %0, %17 : vector<8x128xf32>
    %19 = arith.addf %12, %14 : vector<8x128xf32>
    %20 = arith.addf %0, %19 : vector<8x128xf32>
    %c1_i32 = arith.constant 1 : i32
    %c8_i32_3 = arith.constant 8 : i32
    %21 = arith.muli %c1_i32, %c8_i32_3 : i32
    %22 = tpu.assume_multiple %21, 8 : i32
    %23 = arith.index_cast %22 : i32 to index
    %c0_4 = arith.constant 0 : index
    %24 = vector.load %arg1[%23, %c0_4] : memref<16x128xf32, #tpu.memory_space<vmem>>, vector<8x128xf32>
    %25 = arith.index_cast %22 : i32 to index
    %c0_5 = arith.constant 0 : index
    %26 = vector.load %arg2[%25, %c0_5] : memref<16x128xf32, #tpu.memory_space<vmem>>, vector<8x128xf32>
    %cst_6 = arith.constant 0.000000e+00 : f32
    %27 = vector.broadcast %cst_6 : f32 to vector<8x128xf32>
    %28 = arith.cmpf ogt, %24, %27 : vector<8x128xf32>
    %cst_7 = arith.constant 5.000000e-01 : f32
    %29 = vector.broadcast %cst_7 : f32 to vector<8x128xf32>
    %30 = arith.cmpf ogt, %26, %29 : vector<8x128xf32>
    %31 = arith.extui %28 : vector<8x128xi1> to vector<8x128xi32>
    %32 = arith.sitofp %31 : vector<8x128xi32> to vector<8x128xf32>
    %33 = arith.extui %30 : vector<8x128xi1> to vector<8x128xi32>
    %34 = arith.sitofp %33 : vector<8x128xi32> to vector<8x128xf32>
    %35 = arith.andi %28, %30 : vector<8x128xi1>
    %36 = arith.extui %35 : vector<8x128xi1> to vector<8x128xi32>
    %37 = arith.sitofp %36 : vector<8x128xi32> to vector<8x128xf32>
    %38 = arith.addf %18, %37 : vector<8x128xf32>
    %39 = arith.addf %32, %34 : vector<8x128xf32>
    %40 = arith.addf %20, %39 : vector<8x128xf32>
    %c2_i32 = arith.constant 2 : i32
    %41 = tpu.concatenate %38, %40 in 0 : vector<8x128xf32>, vector<8x128xf32> -> vector<16x128xf32>
    %42 = vector.shape_cast %41 : vector<16x128xf32> to vector<1x16x128xf32>
    %c0_8 = arith.constant 0 : index
    %c0_9 = arith.constant 0 : index
    %c0_10 = arith.constant 0 : index
    %43 = vector.load %arg3[%c0_8, %c0_9, %c0_10] : memref<1x16x128xf32, #tpu.memory_space<vmem>>, vector<1x16x128xf32>
    tpu.vector_store %arg3[%c0_8, %c0_9, %c0_10], %42 {strides = array<i32>} : memref<1x16x128xf32, #tpu.memory_space<vmem>>, vector<1x16x128xf32>,
    return
  }
  func.func @transform_0(%arg0: i32) -> (i32, i32) {
    %c0_i32 = arith.constant 0 : i32
    %c0_i32_0 = arith.constant 0 : i32
    return %arg0, %c0_i32 : i32, i32
  }
  func.func @transform_1(%arg0: i32) -> (i32, i32) {
    %c0_i32 = arith.constant 0 : i32
    %c0_i32_0 = arith.constant 0 : i32
    return %arg0, %c0_i32 : i32, i32
  }
  func.func @transform_2(%arg0: i32) -> (i32, i32, i32) {
    %c0_i32 = arith.constant 0 : i32
    %c0_i32_0 = arith.constant 0 : i32
    %c0_i32_1 = arith.constant 0 : i32
    return %arg0, %c0_i32, %c0_i32_0 : i32, i32, i32
  }
}

</mosaic_0001>

<llo_original>
// kernel: dice_loss.1
$region0: #{dice_loss.1}
  #allocation0 [shape = 'u32[]', space=smem, size = 0x4, offset = 0x4, fixed_abs, tag = 'smem constant byte address 0x4 - core index']
  #allocation1 [shape = 'u32[144,128]{1,0:T(1,128)}', space=vmem, size = 0x12000, scoped, tag = 'internal scratch']
  %s0 = inlined_call_operand.vmem [shape: f32[16,128], index: 0, kind: input, shape index: {}]
  %s1 = inlined_call_operand.vmem [shape: f32[16,128], index: 1, kind: input, shape index: {}]
  %s2 = inlined_call_operand.vmem [shape: f32[1,16,128], index: 2, kind: output, shape index: {}]
  %s3 = sld [smem:[#allocation0]]
  $region18: #{dice_loss.1} parent=0
    _
  %s5 = ssub.s32 1, %s3
  %s6 = scalar_select 0, %s5, %s3
  // Predicated region
  $region2: #{dice_loss.1} parent=0 // pred_check
    _
  $region3: #{dice_loss.1} parent=0 // pred_check_branch
    %8 = sbr.rel (0) target = $region5
  $region4: #{dice_loss.1} parent=0 // pred_region
    _
  $region5: #{dice_loss.1} parent=0 // pred_fallthru
    _
  // Predicated region
  $region6: #{dice_loss.1} parent=0 // pred_check
    _
  $region7: #{dice_loss.1} parent=0 // pred_check_branch
    %10 = sbr.rel (0) target = $region9
  $region8: #{dice_loss.1} parent=0 // pred_region
    _
  $region9: #{dice_loss.1} parent=0 // pred_fallthru
    _
  %v11 = vld [vmem:[%s0] sm:$0xff]
  %v12 = vld [vmem:[%s1] sm:$0xff]
  %vm13 = vcmp.gt.f32.partialorder %v11, 0.0
  %vm14 = vcmp.gt.f32.partialorder %v12, 0.5
  %v15 = vsel %vm13, 1, 0
  %v16 = vcvt.s32.f32 %v15
  %v17 = vsel %vm14, 1, 0
  %v18 = vcvt.s32.f32 %v17
  %vm19 = vmand %vm13, %vm14
  %v20 = vsel %vm19, 1, 0
  %v21 = vcvt.s32.f32 %v20
  %v22 = vadd.f32 %v21, 0.0
  %v23 = vadd.f32 %v16, %v18
  %v24 = vadd.f32 %v23, 0.0
  %s25 = scalar_lea.vmem %s0, 8
  %v26 = vld [vmem:[%s25] sm:$0xff]
  %s27 = scalar_lea.vmem %s1, 8
  %v28 = vld [vmem:[%s27] sm:$0xff]
  %vm29 = vcmp.gt.f32.partialorder %v26, 0.0
  %vm30 = vcmp.gt.f32.partialorder %v28, 0.5
  %v31 = vsel %vm29, 1, 0
  %v32 = vcvt.s32.f32 %v31
  %v33 = vsel %vm30, 1, 0
  %v34 = vcvt.s32.f32 %v33
  %vm35 = vmand %vm29, %vm30
  %v36 = vsel %vm35, 1, 0
  %v37 = vcvt.s32.f32 %v36
  %v38 = vadd.f32 %v22, %v37
  %v39 = vadd.f32 %v32, %v34
  %v40 = vadd.f32 %v24, %v39
  %41 = vst [vmem:[%s2] sm:$0xff] %v38
  %42 = vst [vmem:[%s2 + $0x8] sm:$0xff] %v40
  // Predicated region
  $region10: #{dice_loss.1} parent=0 // pred_check
    _
  $region11: #{dice_loss.1} parent=0 // pred_check_branch
    %44 = sbr.rel (0) target = $region13
  $region12: #{dice_loss.1} parent=0 // pred_region
    _
  $region13: #{dice_loss.1} parent=0 // pred_fallthru
    _
  // Predicated region
  $region14: #{dice_loss.1} parent=0 // pred_check
    _
  $region15: #{dice_loss.1} parent=0 // pred_check_branch
    %46 = sbr.rel (0) target = $region17
  $region16: #{dice_loss.1} parent=0 // pred_region
    _
  $region17: #{dice_loss.1} parent=0 // pred_fallthru
    _

</llo_original>
